<compile_context>
chip_gen: v7x
topology: tpu7x:2x2x1
jax: 0.10.0
libtpu: 0.0.40
codegen_flags: <defaults>
</compile_context>

<pallas_src>
import jax
import jax.numpy as jnp
from jax.experimental import pallas as pl
from jax.experimental.pallas import tpu as pltpu


def _bayesian_nn_kernel(x_ref, w1_ref, b1_ref, w2_ref, b2_ref, o_ref):
    # Cast activations to the (pre-cast) weight compute dtype in-kernel; the
    # convert is VPU work hidden under the activation DMA.
    x = x_ref[...].astype(w1_ref.dtype)
    # fc1: x @ w1 + b1 -> ReLU   (MXU matmul, f32 accumulation)
    h = jnp.dot(x, w1_ref[...], preferred_element_type=jnp.float32)
    h = jnp.maximum(h + b1_ref[...], 0.0)          # bias (1, H) broadcasts; ReLU on VPU
    # fc2: h @ w2 + b2  (cast h to the weight compute dtype, accumulate in f32)
    out = jnp.dot(h.astype(w2_ref.dtype), w2_ref[...],
                  preferred_element_type=jnp.float32)
    o_ref[...] = (out + b2_ref[...]).astype(o_ref.dtype)


def _round_up(v, m):
    return (v + m - 1) // m * m


def _round_down(v, m):
    return max(m, (v // m) * m)


def prepare_params(w1, b1, w2, b2, *, compute_dtype=jnp.bfloat16):
    """One-time weight-side prep: cast weights to the MXU compute dtype and
    reshape biases to (1, N) f32 so they broadcast on the (sublane, lane) grid.

    Call this once per set of (sampled) weights; bayesian_nn_forward then does
    no per-call XLA prep ops on the weight side.
    """
    if compute_dtype is not None:
        w1 = w1.astype(compute_dtype)
        w2 = w2.astype(compute_dtype)
    b1_2d = jnp.asarray(b1, jnp.float32).reshape(1, -1)
    b2_2d = jnp.asarray(b2, jnp.float32).reshape(1, -1)
    return (w1, b1_2d, w2, b2_2d)


def bayesian_nn_forward(x, params, *, block_rows=512, min_grid_steps=4):
    """BayesianNN.forward: relu(x @ w1 + b1) @ w2 + b2 in one Pallas call.

    x:      [B, D_in]  (any float dtype; cast to the weight dtype in-kernel)
    params: output of prepare_params(): (w1 [D_in,H], b1 [1,H] f32,
                                         w2 [H,D_out], b2 [1,D_out] f32)
    block_rows:      requested batch tile size (rounded down to 8 sublanes)
    min_grid_steps:  shrink the tile (when B allows) so the grid has at least
                     this many steps -> on v7x each TensorCore gets >= 2 steps
                     and DMA for step i+1 overlaps compute of step i.
    returns [B, D_out] float32
    """
    w1, b1_2d, w2, b2_2d = params
    B, d_in = x.shape
    h_dim = w1.shape[1]
    d_out = w2.shape[1]

    # Batch tile: multiple of 8 sublanes, no larger than the (rounded-up) batch.
    tb = min(_round_down(block_rows, 8), _round_up(B, 8))
    # Keep enough grid steps for megacore split + pipelining when B allows it.
    if min_grid_steps > 1 and _round_up(B, 8) >= min_grid_steps * 8:
        tb = min(tb, _round_down(pl.cdiv(B, min_grid_steps), 8))

    grid = (pl.cdiv(B, tb),)   # partial trailing block handled by Pallas

    # Cost estimate with the TRUE d_out (no padding anywhere).
    flops = 2 * B * (d_in * h_dim + h_dim * d_out)
    bytes_accessed = (
        x.size * x.dtype.itemsize
        + w1.size * w1.dtype.itemsize
        + b1_2d.size * b1_2d.dtype.itemsize
        + w2.size * w2.dtype.itemsize
        + b2_2d.size * b2_2d.dtype.itemsize
        + B * d_out * 4
    )

    # Per-step VMEM (tb=512, f32 x, d_out=8): x tile ~32 KiB, out tile ~16 KiB,
    # doubled for pipelining, + tiny resident weights -> well under the default
    # scoped VMEM limit on all of v5e/v6e/v7x; no vmem_limit_bytes needed.
    return pl.pallas_call(
        _bayesian_nn_kernel,
        out_shape=jax.ShapeDtypeStruct((B, d_out), jnp.float32),
        grid=grid,
        in_specs=[
            # Activations: tiled over batch, pipelined HBM<->VMEM.
            pl.BlockSpec((tb, d_in), lambda i: (i, 0)),
            # Weights / biases: constant index_map -> VMEM-resident across steps.
            pl.BlockSpec((d_in, h_dim), lambda i: (0, 0)),
            pl.BlockSpec((1, h_dim), lambda i: (0, 0)),
            pl.BlockSpec((h_dim, d_out), lambda i: (0, 0)),
            pl.BlockSpec((1, d_out), lambda i: (0, 0)),
        ],
        # Unpadded output block: last dim (d_out) equals the full array dim,
        # sublane dim is a multiple of 8 -> legal, 16x fewer HBM write bytes
        # than padding d_out to 128, and no post-call slice pass.
        out_specs=pl.BlockSpec((tb, d_out), lambda i: (i, 0)),
        compiler_params=pltpu.CompilerParams(
            # Batch tiles are independent -> shardable across v7x's 2 TensorCores.
            dimension_semantics=("parallel",),
        ),
        cost_estimate=pl.CostEstimate(
            flops=flops, transcendentals=0, bytes_accessed=bytes_accessed
        ),
    )(x, w1, b1_2d, w2, b2_2d)


if __name__ == "__main__":
    # Shapes implied by the module: Linear(input_dim, hidden_dim) -> Linear(hidden_dim, output_dim).
    # Stack many Monte-Carlo forward passes' rows into one call (the structural win).
    input_dim, hidden_dim, output_dim = 16, 32, 8
    per_sample_batch, mc_samples = 8, 64
    batch = per_sample_batch * mc_samples          # 512 rows -> grid of 4 x 128-row tiles

    key = jax.random.PRNGKey(0)
    kx, kw1, kb1, kw2, kb2 = jax.random.split(key, 5)

    x = jax.random.normal(kx, (batch, input_dim), dtype=jnp.float32)
    # Deterministic "nn.Linear"-style init (uniform in [-1/sqrt(fan_in), 1/sqrt(fan_in)]).
    lim1 = 1.0 / jnp.sqrt(input_dim)
    lim2 = 1.0 / jnp.sqrt(hidden_dim)
    w1 = jax.random.uniform(kw1, (input_dim, hidden_dim), jnp.float32, -lim1, lim1)
    b1 = jax.random.uniform(kb1, (hidden_dim,), jnp.float32, -lim1, lim1)
    w2 = jax.random.uniform(kw2, (hidden_dim, output_dim), jnp.float32, -lim2, lim2)
    b2 = jax.random.uniform(kb2, (output_dim,), jnp.float32, -lim2, lim2)

    # Reference in plain JAX (same semantics as torch: relu(fc1(x)) -> fc2).
    ref = jnp.maximum(x @ w1 + b1, 0.0) @ w2 + b2

    # f32-operand path: exact match to the reference.
    params_f32 = prepare_params(w1, b1, w2, b2, compute_dtype=jnp.float32)
    out = bayesian_nn_forward(x, params_f32)
    out = jax.block_until_ready(out)
    assert out.shape == (batch, output_dim)
    assert jnp.allclose(out, ref, atol=1e-5, rtol=1e-5)

    # Default bf16-operand MXU path (f32 accumulation): looser tolerance per bf16 mantissa.
    params_bf16 = prepare_params(w1, b1, w2, b2)            # bf16 is the default
    out_bf16 = bayesian_nn_forward(x, params_bf16)
    out_bf16 = jax.block_until_ready(out_bf16)
    assert jnp.allclose(out_bf16, ref, atol=5e-2, rtol=5e-2)

    # Robustness: batch not divisible by the tile (partial trailing block).
    x_odd = x[: batch - 24]                                  # 488 rows, tb=128 -> partial tail
    out_odd = jax.block_until_ready(bayesian_nn_forward(x_odd, params_f32))
    assert jnp.allclose(out_odd, ref[: batch - 24], atol=1e-5, rtol=1e-5)

    print("KERNEL_OK")
</pallas_src>

<mosaic_0001>
module attributes {stable_mosaic.version = 11 : i64} {
  func.func @_bayesian_nn_kernel(%arg0: i32, %arg1: memref<128x16xf32, #tpu.memory_space<vmem>>, %arg2: memref<16x32xf32, #tpu.memory_space<vmem>>, %arg3: memref<1x32xf32, #tpu.memory_space<vmem>>, %arg4: memref<32x8xf32, #tpu.memory_space<vmem>>, %arg5: memref<1x8xf32, #tpu.memory_space<vmem>>, %arg6: memref<128x8xf32, #tpu.memory_space<vmem>>) attributes {dimension_semantics = [#tpu.dimension_semantics<parallel>], iteration_bounds = array<i64: 4>, scalar_prefetch = 0 : i64, scratch_operands = 0 : i64, tpu.core_type = #tpu.core_type<tc>, window_params = [{transform_indices = @transform_0, window_bounds = array<i64: 128, 16>}, {pipeline_mode = #tpu.pipeline_mode<synchronous>, transform_indices = @transform_1, window_bounds = array<i64: 16, 32>}, {pipeline_mode = #tpu.pipeline_mode<synchronous>, transform_indices = @transform_2, window_bounds = array<i64: 1, 32>}, {pipeline_mode = #tpu.pipeline_mode<synchronous>, transform_indices = @transform_3, window_bounds = array<i64: 32, 8>}, {pipeline_mode = #tpu.pipeline_mode<synchronous>, transform_indices = @transform_4, window_bounds = array<i64: 1, 8>}, {transform_indices = @transform_5, window_bounds = array<i64: 128, 8>}]} {
    %c0 = arith.constant 0 : index
    %c0_0 = arith.constant 0 : index
    %0 = vector.load %arg1[%c0, %c0_0] : memref<128x16xf32, #tpu.memory_space<vmem>>, vector<128x16xf32>
    %c0_1 = arith.constant 0 : index
    %c0_2 = arith.constant 0 : index
    %1 = vector.load %arg2[%c0_1, %c0_2] : memref<16x32xf32, #tpu.memory_space<vmem>>, vector<16x32xf32>
    %cst = arith.constant dense<0.000000e+00> : vector<128x32xf32>
    %2 = tpu.matmul %0, %1, %cst {dimension_numbers = #tpu.dot_dimension_numbers<[1], [0], [0], [1], [0, 0, 1, 1], [], []>} : vector<128x16xf32>, vector<16x32xf32>, vector<128x32xf32> -> vector<128x32xf32>
    %c0_3 = arith.constant 0 : index
    %c0_4 = arith.constant 0 : index
    %3 = vector.load %arg3[%c0_3, %c0_4] : memref<1x32xf32, #tpu.memory_space<vmem>>, vector<1x32xf32>
    %4 = vector.broadcast %3 : vector<1x32xf32> to vector<128x32xf32>
    %5 = arith.addf %2, %4 : vector<128x32xf32>
    %cst_5 = arith.constant 0.000000e+00 : f32
    %6 = vector.broadcast %cst_5 : f32 to vector<128x32xf32>
    %7 = arith.maximumf %5, %6 : vector<128x32xf32>
    %c0_6 = arith.constant 0 : index
    %c0_7 = arith.constant 0 : index
    %8 = vector.load %arg4[%c0_6, %c0_7] : memref<32x8xf32, #tpu.memory_space<vmem>>, vector<32x8xf32>
    %cst_8 = arith.constant dense<0.000000e+00> : vector<128x8xf32>
    %9 = tpu.matmul %7, %8, %cst_8 {dimension_numbers = #tpu.dot_dimension_numbers<[1], [0], [0], [1], [0, 0, 1, 1], [], []>} : vector<128x32xf32>, vector<32x8xf32>, vector<128x8xf32> -> vector<128x8xf32>
    %c0_9 = arith.constant 0 : index
    %c0_10 = arith.constant 0 : index
    %10 = vector.load %arg5[%c0_9, %c0_10] : memref<1x8xf32, #tpu.memory_space<vmem>>, vector<1x8xf32>
    %11 = vector.broadcast %10 : vector<1x8xf32> to vector<128x8xf32>
    %12 = arith.addf %9, %11 : vector<128x8xf32>
    %c0_11 = arith.constant 0 : index
    %c0_12 = arith.constant 0 : index
    %13 = vector.load %arg6[%c0_11, %c0_12] : memref<128x8xf32, #tpu.memory_space<vmem>>, vector<128x8xf32>
    tpu.vector_store %arg6[%c0_11, %c0_12], %12 {strides = array<i32>} : memref<128x8xf32, #tpu.memory_space<vmem>>, vector<128x8xf32>,
    return
  }
  func.func @transform_0(%arg0: i32) -> (i32, i32) {
    %c0_i32 = arith.constant 0 : i32
    %c0_i32_0 = arith.constant 0 : i32
    return %arg0, %c0_i32 : i32, i32
  }
  func.func @transform_1(%arg0: i32) -> (i32, i32) {
    %c0_i32 = arith.constant 0 : i32
    %c0_i32_0 = arith.constant 0 : i32
    %c0_i32_1 = arith.constant 0 : i32
    return %c0_i32, %c0_i32_0 : i32, i32
  }
  func.func @transform_2(%arg0: i32) -> (i32, i32) {
    %c0_i32 = arith.constant 0 : i32
    %c0_i32_0 = arith.constant 0 : i32
    %c0_i32_1 = arith.constant 0 : i32
    return %c0_i32, %c0_i32_0 : i32, i32
  }
  func.func @transform_3(%arg0: i32) -> (i32, i32) {
    %c0_i32 = arith.constant 0 : i32
    %c0_i32_0 = arith.constant 0 : i32
    %c0_i32_1 = arith.constant 0 : i32
    return %c0_i32, %c0_i32_0 : i32, i32
  }
  func.func @transform_4(%arg0: i32) -> (i32, i32) {
    %c0_i32 = arith.constant 0 : i32
    %c0_i32_0 = arith.constant 0 : i32
    %c0_i32_1 = arith.constant 0 : i32
    return %c0_i32, %c0_i32_0 : i32, i32
  }
  func.func @transform_5(%arg0: i32) -> (i32, i32) {
    %c0_i32 = arith.constant 0 : i32
    %c0_i32_0 = arith.constant 0 : i32
    return %arg0, %c0_i32 : i32, i32
  }
}

</mosaic_0001>

<llo_original>
// kernel: tpu_custom_call.1
$region0: #{tpu_custom_call.1}
  #allocation0 [shape = 'u32[]', space=smem, size = 0x4, offset = 0x4, fixed_abs, tag = 'smem constant byte address 0x4 - core index']
  #allocation1 [shape = 'u32[144,128]{1,0:T(1,128)}', space=vmem, size = 0x12000, scoped, tag = 'internal scratch']
  %s0 = inlined_call_operand.vmem [shape: f32[512,16], index: 0, kind: input, shape index: {}]
  %s1 = inlined_call_operand.vmem [shape: f32[16,32], index: 1, kind: input, shape index: {}]
  %s2 = inlined_call_operand.vmem [shape: f32[1,32], index: 2, kind: input, shape index: {}]
  %s3 = inlined_call_operand.vmem [shape: f32[32,8], index: 3, kind: input, shape index: {}]
  %s4 = inlined_call_operand.vmem [shape: f32[1,8], index: 4, kind: input, shape index: {}]
  %s5 = inlined_call_operand.vmem [shape: f32[512,8], index: 5, kind: output, shape index: {}]
  %s6 = sld [smem:[#allocation0]]
  $region53: #{tpu_custom_call.1} parent=0
    _
  %s8 = ssub.s32 1, %s6
  %s9 = scalar_select 0, %s8, %s6
  loop: start=0, step=1, limit=6
  $region2: #{tpu_custom_call.1} parent=0 // loop_pre_header
    _
  $region3: #{tpu_custom_call.1} parent=0 // loop_header
    %s11 = sphi 0, %s15
    %p12 = scmp.ge.s32.totalorder %s11, 6
    %s21 = sphi 0, %s23
    %s24 = sphi 0, %s21
    %s25 = sphi 0, %s24
    %s41 = sphi 0, %s25
    %s45 = sphi 0, %s45
    %s47 = sphi 0, %s45
    %s48 = sphi 0, %s47
    %s62 = sphi 0, %s48
    %s66 = sphi 0, %s66
    %s68 = sphi 0, %s66
    %s69 = sphi 0, %s68
    %s83 = sphi 0, %s69
    %s87 = sphi 0, %s87
    %s89 = sphi 0, %s87
    %s90 = sphi 0, %s89
    %s104 = sphi 0, %s90
    %s108 = sphi 0, %s108
    %s110 = sphi 0, %s108
    %s111 = sphi 0, %s110
    %s125 = sphi 0, %s111
    %s131 = sphi 0, %s133
    %s134 = sphi 0, %s131
    %s135 = sphi 0, %s134
    %s151 = sphi 0, %s135
  $region4: #{tpu_custom_call.1} parent=0 // loop_header_branch
    %14 = sbr.rel (%p12) target = $region8
  $region5: #{tpu_custom_call.1} parent=0 // loop_body
    %s16 = ssub.s32 %s11, 1
    %s17 = ssub.s32 %s11, 2
    %s18 = sadd.s32 %s11, 1
    %s19 = ssub.s32 %s11, %s18
    %p20 = scmp.eq.s32.totalorder %s19, 0
    %s22 = sadd.s32 %s21, 1
    %s23 = scalar_select %p20, %s21, %s22
    %p26 = pneg %p20
    %p27 = scmp.eq.s32.totalorder %s11, 3
    %p28 = por %p26, %p27
    %p29 = scmp.ne.s32.totalorder %s21, %s24
    %p30 = scmp.eq.s32.totalorder %s11, 0
    %p31 = por %p29, %p30
    %p32 = scmp.ne.s32.totalorder %s21, %s24
    %p33 = scmp.eq.s32.totalorder %s16, 3
    %p34 = por %p32, %p33
    %p35 = scmp.ne.s32.totalorder %s24, %s25
    %p36 = scmp.eq.s32.totalorder %s16, 0
    %p37 = por %p35, %p36
    %p38 = scmp.ne.s32.totalorder %s24, %s25
    %p39 = scmp.eq.s32.totalorder %s17, 3
    %p40 = por %p38, %p39
    %p42 = scmp.ne.s32.totalorder %s25, %s41
    %p43 = scmp.eq.s32.totalorder %s17, 0
    %p44 = por %p42, %p43
    %s46 = sadd.s32 %s45, 1
    %p49 = scmp.eq.s32.totalorder %s11, 3
    %p50 = scmp.ne.s32.totalorder %s45, %s47
    %p51 = scmp.eq.s32.totalorder %s11, 0
    %p52 = por %p50, %p51
    %p53 = scmp.ne.s32.totalorder %s45, %s47
    %p54 = scmp.eq.s32.totalorder %s16, 3
    %p55 = por %p53, %p54
    %p56 = scmp.ne.s32.totalorder %s47, %s48
    %p57 = scmp.eq.s32.totalorder %s16, 0
    %p58 = por %p56, %p57
    %p59 = scmp.ne.s32.totalorder %s47, %s48
    %p60 = scmp.eq.s32.totalorder %s17, 3
    %p61 = por %p59, %p60
    %p63 = scmp.ne.s32.totalorder %s48, %s62
    %p64 = scmp.eq.s32.totalorder %s17, 0
    %p65 = por %p63, %p64
    %s67 = sadd.s32 %s66, 1
    %p70 = scmp.eq.s32.totalorder %s11, 3
    %p71 = scmp.ne.s32.totalorder %s66, %s68
    %p72 = scmp.eq.s32.totalorder %s11, 0
    %p73 = por %p71, %p72
    %p74 = scmp.ne.s32.totalorder %s66, %s68
    %p75 = scmp.eq.s32.totalorder %s16, 3
    %p76 = por %p74, %p75
    %p77 = scmp.ne.s32.totalorder %s68, %s69
    %p78 = scmp.eq.s32.totalorder %s16, 0
    %p79 = por %p77, %p78
    %p80 = scmp.ne.s32.totalorder %s68, %s69
    %p81 = scmp.eq.s32.totalorder %s17, 3
    %p82 = por %p80, %p81
    %p84 = scmp.ne.s32.totalorder %s69, %s83
    %p85 = scmp.eq.s32.totalorder %s17, 0
    %p86 = por %p84, %p85
    %s88 = sadd.s32 %s87, 1
    %p91 = scmp.eq.s32.totalorder %s11, 3
    %p92 = scmp.ne.s32.totalorder %s87, %s89
    %p93 = scmp.eq.s32.totalorder %s11, 0
    %p94 = por %p92, %p93
    %p95 = scmp.ne.s32.totalorder %s87, %s89
    %p96 = scmp.eq.s32.totalorder %s16, 3
    %p97 = por %p95, %p96
    %p98 = scmp.ne.s32.totalorder %s89, %s90
    %p99 = scmp.eq.s32.totalorder %s16, 0
    %p100 = por %p98, %p99
    %p101 = scmp.ne.s32.totalorder %s89, %s90
    %p102 = scmp.eq.s32.totalorder %s17, 3
    %p103 = por %p101, %p102
    %p105 = scmp.ne.s32.totalorder %s90, %s104
    %p106 = scmp.eq.s32.totalorder %s17, 0
    %p107 = por %p105, %p106
    %s109 = sadd.s32 %s108, 1
    %p112 = scmp.eq.s32.totalorder %s11, 3
    %p113 = scmp.ne.s32.totalorder %s108, %s110
    %p114 = scmp.eq.s32.totalorder %s11, 0
    %p115 = por %p113, %p114
    %p116 = scmp.ne.s32.totalorder %s108, %s110
    %p117 = scmp.eq.s32.totalorder %s16, 3
    %p118 = por %p116, %p117
    %p119 = scmp.ne.s32.totalorder %s110, %s111
    %p120 = scmp.eq.s32.totalorder %s16, 0
    %p121 = por %p119, %p120
    %p122 = scmp.ne.s32.totalorder %s110, %s111
    %p123 = scmp.eq.s32.totalorder %s17, 3
    %p124 = por %p122, %p123
    %p126 = scmp.ne.s32.totalorder %s111, %s125
    %p127 = scmp.eq.s32.totalorder %s17, 0
    %p128 = por %p126, %p127
    %s129 = ssub.s32 %s11, %s18
    %p130 = scmp.eq.s32.totalorder %s129, 0
    %s132 = sadd.s32 %s131, 1
    %s133 = scalar_select %p130, %s131, %s132
    %p136 = pneg %p130
    %p137 = scmp.eq.s32.totalorder %s11, 3
    %p138 = por %p136, %p137
    %p139 = scmp.ne.s32.totalorder %s131, %s134
    %p140 = scmp.eq.s32.totalorder %s11, 0
    %p141 = por %p139, %p140
    %p142 = scmp.ne.s32.totalorder %s131, %s134
    %p143 = scmp.eq.s32.totalorder %s16, 3
    %p144 = por %p142, %p143
    %p145 = scmp.ne.s32.totalorder %s134, %s135
    %p146 = scmp.eq.s32.totalorder %s16, 0
    %p147 = por %p145, %p146
    %p148 = scmp.ne.s32.totalorder %s134, %s135
    %p149 = scmp.eq.s32.totalorder %s17, 3
    %p150 = por %p148, %p149
    %p152 = scmp.ne.s32.totalorder %s135, %s151
    %p153 = scmp.eq.s32.totalorder %s17, 0
    %p154 = por %p152, %p153
    %p155 = scmp.le.s32.totalorder 1, %s11
    %p156 = scmp.lt.s32.totalorder %s11, 5
    %p157 = pnand %p155, %p156
    %p158 = pneg %p157
    // Predicated region
    $region9: #{tpu_custom_call.1} parent=5 // pred_check
      _
    $region10: #{tpu_custom_call.1} parent=5 // pred_check_branch
      %160 = sbr.rel (%p157) target = $region12
    $region11: #{tpu_custom_call.1} parent=5 // pred_region
      %s161 = ssub.s32 %s11, 1
      // Predicated region
      $region13: #{tpu_custom_call.1} parent=11 // pred_check
        %p162 = pneg %p58
      $region14: #{tpu_custom_call.1} parent=11 // pred_check_branch
        %164 = sbr.rel (%p162) target = $region16
      $region15: #{tpu_custom_call.1} parent=11 // pred_region
        _
      $region16: #{tpu_custom_call.1} parent=11 // pred_fallthru
        _
      // Predicated region
      $region17: #{tpu_custom_call.1} parent=11 // pred_check
        %p165 = pneg %p79
      $region18: #{tpu_custom_call.1} parent=11 // pred_check_branch
        %167 = sbr.rel (%p165) target = $region20
      $region19: #{tpu_custom_call.1} parent=11 // pred_region
        _
      $region20: #{tpu_custom_call.1} parent=11 // pred_fallthru
        _
      // Predicated region
      $region21: #{tpu_custom_call.1} parent=11 // pred_check
        %p168 = pneg %p100
      $region22: #{tpu_custom_call.1} parent=11 // pred_check_branch
        %170 = sbr.rel (%p168) target = $region24
      $region23: #{tpu_custom_call.1} parent=11 // pred_region
        _
      $region24: #{tpu_custom_call.1} parent=11 // pred_fallthru
        _
      // Predicated region
      $region25: #{tpu_custom_call.1} parent=11 // pred_check
        %p171 = pneg %p121
      $region26: #{tpu_custom_call.1} parent=11 // pred_check_branch
        %173 = sbr.rel (%p171) target = $region28
      $region27: #{tpu_custom_call.1} parent=11 // pred_region
        _
      $region28: #{tpu_custom_call.1} parent=11 // pred_fallthru
        _
    $region12: #{tpu_custom_call.1} parent=5 // pred_fallthru
      _
    %p174 = scmp.lt.s32.totalorder %s11, 4
    // Predicated region
    $region29: #{tpu_custom_call.1} parent=5 // pred_check
      %p175 = pneg %p174
    $region30: #{tpu_custom_call.1} parent=5 // pred_check_branch
      %177 = sbr.rel (%p175) target = $region32
    $region31: #{tpu_custom_call.1} parent=5 // pred_region
      // Predicated region
      $region33: #{tpu_custom_call.1} parent=31 // pred_check
        %p178 = pneg %p31
      $region34: #{tpu_custom_call.1} parent=31 // pred_check_branch
        %180 = sbr.rel (%p178) target = $region36
      $region35: #{tpu_custom_call.1} parent=31 // pred_region
        %s181 = smul.u32 16, %s11
        %p182 = scmp.lt.s32.totalorder %s181, 63
        %s183 = scalar_select %p182, %s181, 63
        %s184 = smul.addr %s183, 8
        %s185 = scalar_lea.vmem %s0, %s184
        %s186 = smul.u32 16, %s11
      $region36: #{tpu_custom_call.1} parent=31 // pred_fallthru
        _
    $region32: #{tpu_custom_call.1} parent=5 // pred_fallthru
      _
    %p187 = scmp.le.s32.totalorder 1, %s11
    %p188 = scmp.lt.s32.totalorder %s11, 5
    %p189 = pnand %p187, %p188
    %p190 = pneg %p189
    // Predicated region
    $region37: #{tpu_custom_call.1} parent=5 // pred_check
      _
    $region38: #{tpu_custom_call.1} parent=5 // pred_check_branch
      %192 = sbr.rel (%p189) target = $region40
    $region39: #{tpu_custom_call.1} parent=5 // pred_region
      %s193 = ssub.s32 %s11, 1
      %s194 = smul.u32 16, %s16
      %p195 = scmp.lt.s32.totalorder %s194, 63
      %s196 = scalar_select %p195, %s194, 63
      %s197 = smul.addr %s196, 8
      %s198 = scalar_lea.vmem %s0, %s197
      %p199 = pneg %p37
      %p200 = pneg %p34
      %p201 = pneg %p58
      %p202 = pneg %p55
      %p203 = pneg %p79
      %p204 = pneg %p76
      %p205 = pneg %p100
      %p206 = pneg %p97
      %p207 = pneg %p121
      %p208 = pneg %p118
      %p209 = pneg %p147
      %p210 = pneg %p144
      %s211 = smul.u32 16, %s16
      %p212 = scmp.lt.s32.totalorder %s211, 63
      %s213 = scalar_select %p212, %s211, 63
      %s214 = smul.addr %s213, 8
      %s215 = scalar_lea.vmem %s5, %s214
      %s216 = smul.u32 16, %s16
      %p217 = scmp.lt.s32.totalorder %s216, 63
      %s218 = scalar_select %p217, %s216, 63
      %s219 = smul.addr %s218, 8
      %s220 = scalar_lea.vmem %s0, %s219
      %s221 = smul.u32 16, %s16
      %s222 = smul.u32 16, %s16
      %p223 = scmp.lt.s32.totalorder %s222, 63
      %s224 = scalar_select %p223, %s222, 63
      %s225 = smul.addr %s224, 8
      %s226 = scalar_lea.vmem %s5, %s225
      %s227 = smul.u32 16, %s16
      %v228 = vld [vmem:[%s220] sm:$0xff]
      %v229 = vld [vmem:[%s220 + $0x8] sm:$0xff]
      %v230 = vld [vmem:[%s220 + $0x10] sm:$0xff]
      %v231 = vld [vmem:[%s220 + $0x18] sm:$0xff]
      %v232 = vld [vmem:[%s220 + $0x20] sm:$0xff]
      %v233 = vld [vmem:[%s220 + $0x28] sm:$0xff]
      %v234 = vld [vmem:[%s220 + $0x30] sm:$0xff]
      %v235 = vld [vmem:[%s220 + $0x38] sm:$0xff]
      %v236 = vld [vmem:[%s220 + $0x40] sm:$0xff]
      %v237 = vld [vmem:[%s220 + $0x48] sm:$0xff]
      %v238 = vld [vmem:[%s220 + $0x50] sm:$0xff]
      %v239 = vld [vmem:[%s220 + $0x58] sm:$0xff]
      %v240 = vld [vmem:[%s220 + $0x60] sm:$0xff]
      %v241 = vld [vmem:[%s220 + $0x68] sm:$0xff]
      %v242 = vld [vmem:[%s220 + $0x70] sm:$0xff]
      %v243 = vld [vmem:[%s220 + $0x78] sm:$0xff]
      %v244 = vld [vmem:[%s1] sm:$0xff]
      %v245 = vld [vmem:[%s1 + $0x8] sm:$0xff]
      %v246 = vld [vmem:[%s2] sm:$0x1]
      %v248 = vlaneseq
      %v249 = vshrl.u32 %v248, 7
      %v250 = vsub.s32 0, %v249
      %v251 = vrot.slane %v246, %v250
      %vm253 = vcmask 130048
      %v255 = vsel %vm253, %v228, 0
      %v258 = vsel %vm253, %v229, 0
      %v261 = vsel %vm253, %v230, 0
      %v264 = vsel %vm253, %v231, 0
      %v267 = vsel %vm253, %v232, 0
      %v270 = vsel %vm253, %v233, 0
      %v273 = vsel %vm253, %v234, 0
      %v276 = vsel %vm253, %v235, 0
      %v279 = vsel %vm253, %v236, 0
      %v282 = vsel %vm253, %v237, 0
      %v285 = vsel %vm253, %v238, 0
      %v288 = vsel %vm253, %v239, 0
      %v291 = vsel %vm253, %v240, 0
      %v294 = vsel %vm253, %v241, 0
      %v297 = vsel %vm253, %v242, 0
      %v300 = vsel %vm253, %v243, 0
      %302 = vmatprep.subr.mxu0 0.0
      %303 = vmatpush1.msra.mxu0 %v244
      %304 = vmatprep.subr.mxu0 0.0
      %305 = vmatpush1.msra.mxu0 %v245
      %306 = vmatprep.subr.mxu0 0.0
      %307 = vmatpush1.msra.mxu0 0.0
      %308 = vmatprep.subr.mxu0 0.0
      %309 = vmatpush1.msra.mxu0 0.0
      %310 = vmatprep.subr.mxu0 0.0
      %311 = vmatpush1.msra.mxu0 0.0
      %312 = vmatprep.subr.mxu0 0.0
      %313 = vmatpush1.msra.mxu0 0.0
      %314 = vmatprep.subr.mxu0 0.0
      %315 = vmatpush1.msra.mxu0 0.0
      %316 = vmatprep.subr.mxu0 0.0
      %317 = vmatpush1.msra.mxu0 0.0
      %318 = vmatprep.subr.mxu0 0.0
      %319 = vmatpush1.msra.mxu0 0.0
      %320 = vmatprep.subr.mxu0 0.0
      %321 = vmatpush1.msra.mxu0 0.0
      %322 = vmatprep.subr.mxu0 0.0
      %323 = vmatpush1.msra.mxu0 0.0
      %324 = vmatprep.subr.mxu0 0.0
      %325 = vmatpush1.msra.mxu0 0.0
      %326 = vmatprep.subr.mxu0 0.0
      %327 = vmatpush1.msra.mxu0 0.0
      %328 = vmatprep.subr.mxu0 0.0
      %329 = vmatpush1.msra.mxu0 0.0
      %330 = vmatprep.subr.mxu0 0.0
      %331 = vmatpush1.msra.mxu0 0.0
      %332 = vmatprep.subr.mxu0 0.0
      %333 = vmatpush1.msra.mxu0 0.0
      %334 = vmatprep.subr.mxu0 0.0
      %335 = vmatpush1.msra.mxu0 0.0
      %336 = vmatprep.subr.mxu0 0.0
      %337 = vmatpush1.msra.mxu0 0.0
      %338 = vmatprep.subr.mxu0 0.0
      %339 = vmatpush1.msra.mxu0 0.0
      %340 = vmatprep.subr.mxu0 0.0
      %341 = vmatpush1.msra.mxu0 0.0
      %342 = vmatprep.subr.mxu0 0.0
      %343 = vmatpush1.msra.mxu0 0.0
      %344 = vmatprep.subr.mxu0 0.0
      %345 = vmatpush1.msra.mxu0 0.0
      %346 = vmatprep.subr.mxu0 0.0
      %347 = vmatpush1.msra.mxu0 0.0
      %348 = vmatprep.subr.mxu0 0.0
      %349 = vmatpush1.msra.mxu0 0.0
      %350 = vmatprep.subr.mxu0 0.0
      %351 = vmatpush1.msra.mxu0 0.0
      %352 = vmatprep.subr.mxu0 0.0
      %353 = vmatpush1.msra.mxu0 0.0
      %354 = vmatprep.subr.mxu0 0.0
      %355 = vmatpush1.msra.mxu0 0.0
      %356 = vmatprep.subr.mxu0 0.0
      %357 = vmatpush1.msra.mxu0 0.0
      %358 = vmatprep.subr.mxu0 0.0
      %359 = vmatpush1.msra.mxu0 0.0
      %360 = vmatprep.subr.mxu0 0.0
      %361 = vmatpush1.msra.mxu0 0.0
      %362 = vmatprep.subr.mxu0 0.0
      %363 = vmatpush1.msra.mxu0 0.0
      %364 = vmatprep.subr.mxu0 0.0
      %365 = vmatpush1.msra.mxu0 0.0
      %366 = vmatprep.mubr.f32.mxu0 0.0
      %367 = vmatmul.mubr.f32.gmra.mrb[0].mxu0 %v255
      %v368 = vpop.f32.mrb[0].mxu0
      %v369 = vadd.f32 %v251, %v368
      %v370 = vpop.f32.mrb[0].mxu0
      %371 = vmatprep.mubr.f32.mxu0 0.0
      %372 = vmatmul.mubr.f32.gmra.mrb[0].mxu0 %v258
      %v373 = vpop.f32.mrb[0].mxu0
      %v374 = vadd.f32 %v251, %v373
      %v375 = vpop.f32.mrb[0].mxu0
      %376 = vmatprep.mubr.f32.mxu0 0.0
      %377 = vmatmul.mubr.f32.gmra.mrb[0].mxu0 %v261
      %v378 = vpop.f32.mrb[0].mxu0
      %v379 = vadd.f32 %v251, %v378
      %v380 = vpop.f32.mrb[0].mxu0
      %381 = vmatprep.mubr.f32.mxu0 0.0
      %382 = vmatmul.mubr.f32.gmra.mrb[0].mxu0 %v264
      %v383 = vpop.f32.mrb[0].mxu0
      %v384 = vadd.f32 %v251, %v383
      %v385 = vpop.f32.mrb[0].mxu0
      %386 = vmatprep.mubr.f32.mxu0 0.0
      %387 = vmatmul.mubr.f32.gmra.mrb[0].mxu0 %v267
      %v388 = vpop.f32.mrb[0].mxu0
      %v389 = vadd.f32 %v251, %v388
      %v390 = vpop.f32.mrb[0].mxu0
      %391 = vmatprep.mubr.f32.mxu0 0.0
      %392 = vmatmul.mubr.f32.gmra.mrb[0].mxu0 %v270
      %v393 = vpop.f32.mrb[0].mxu0
      %v394 = vadd.f32 %v251, %v393
      %v395 = vpop.f32.mrb[0].mxu0
      %396 = vmatprep.mubr.f32.mxu0 0.0
      %397 = vmatmul.mubr.f32.gmra.mrb[0].mxu0 %v273
      %v398 = vpop.f32.mrb[0].mxu0
      %v399 = vadd.f32 %v251, %v398
      %v400 = vpop.f32.mrb[0].mxu0
      %401 = vmatprep.mubr.f32.mxu0 0.0
      %402 = vmatmul.mubr.f32.gmra.mrb[0].mxu0 %v276
      %v403 = vpop.f32.mrb[0].mxu0
      %v404 = vadd.f32 %v251, %v403
      %v405 = vpop.f32.mrb[0].mxu0
      %406 = vmatprep.mubr.f32.mxu0 0.0
      %407 = vmatmul.mubr.f32.gmra.mrb[0].mxu0 %v279
      %v408 = vpop.f32.mrb[0].mxu0
      %v409 = vadd.f32 %v251, %v408
      %v410 = vpop.f32.mrb[0].mxu0
      %411 = vmatprep.mubr.f32.mxu0 0.0
      %412 = vmatmul.mubr.f32.gmra.mrb[0].mxu0 %v282
      %v413 = vpop.f32.mrb[0].mxu0
      %v414 = vadd.f32 %v251, %v413
      %v415 = vpop.f32.mrb[0].mxu0
      %416 = vmatprep.mubr.f32.mxu0 0.0
      %417 = vmatmul.mubr.f32.gmra.mrb[0].mxu0 %v285
      %v418 = vpop.f32.mrb[0].mxu0
      %v419 = vadd.f32 %v251, %v418
      %v420 = vpop.f32.mrb[0].mxu0
      %421 = vmatprep.mubr.f32.mxu0 0.0
      %422 = vmatmul.mubr.f32.gmra.mrb[0].mxu0 %v288
      %v423 = vpop.f32.mrb[0].mxu0
      %v424 = vadd.f32 %v251, %v423
      %v425 = vpop.f32.mrb[0].mxu0
      %426 = vmatprep.mubr.f32.mxu0 0.0
      %427 = vmatmul.mubr.f32.gmra.mrb[0].mxu0 %v291
      %v428 = vpop.f32.mrb[0].mxu0
      %v429 = vadd.f32 %v251, %v428
      %v430 = vpop.f32.mrb[0].mxu0
      %431 = vmatprep.mubr.f32.mxu0 0.0
      %432 = vmatmul.mubr.f32.gmra.mrb[0].mxu0 %v294
      %v433 = vpop.f32.mrb[0].mxu0
      %v434 = vadd.f32 %v251, %v433
      %v435 = vpop.f32.mrb[0].mxu0
      %436 = vmatprep.mubr.f32.mxu0 0.0
      %437 = vmatmul.mubr.f32.gmra.mrb[0].mxu0 %v297
      %v438 = vpop.f32.mrb[0].mxu0
      %v439 = vadd.f32 %v251, %v438
      %v440 = vpop.f32.mrb[0].mxu0
      %441 = vmatprep.mubr.f32.mxu0 0.0
      %442 = vmatmul.mubr.f32.gmra.mrb[0].mxu0 %v300
      %v443 = vpop.f32.mrb[0].mxu0
      %v444 = vadd.f32 %v251, %v443
      %v445 = vpop.f32.mrb[0].mxu0
      %446 = vdwg.mxu0
      %v447 = vmax.f32 %v369, 0.0
      %v448 = vmax.f32 %v374, 0.0
      %v449 = vmax.f32 %v379, 0.0
      %v450 = vmax.f32 %v384, 0.0
      %v451 = vmax.f32 %v389, 0.0
      %v452 = vmax.f32 %v394, 0.0
      %v453 = vmax.f32 %v399, 0.0
      %v454 = vmax.f32 %v404, 0.0
      %v455 = vmax.f32 %v409, 0.0
      %v456 = vmax.f32 %v414, 0.0
      %v457 = vmax.f32 %v419, 0.0
      %v458 = vmax.f32 %v424, 0.0
      %v459 = vmax.f32 %v429, 0.0
      %v460 = vmax.f32 %v434, 0.0
      %v461 = vmax.f32 %v439, 0.0
      %v462 = vmax.f32 %v444, 0.0
      %v463 = vld [vmem:[%s3] sm:$0xff]
      %v464 = vld [vmem:[%s3 + $0x8] sm:$0xff]
      %v465 = vld [vmem:[%s3 + $0x10] sm:$0xff]
      %v466 = vld [vmem:[%s3 + $0x18] sm:$0xff]
      %v467 = vld [vmem:[%s4] sm:$0x1]
      %v469 = vlaneseq
      %v470 = vshrl.u32 %v469, 7
      %v471 = vsub.s32 0, %v470
      %v472 = vrot.slane %v467, %v471
      %vm474 = vcmask 261120
      %v476 = vsel %vm474, %v447, 0
      %v479 = vsel %vm474, %v448, 0
      %v482 = vsel %vm474, %v449, 0
      %v485 = vsel %vm474, %v450, 0
      %v488 = vsel %vm474, %v451, 0
      %v491 = vsel %vm474, %v452, 0
      %v494 = vsel %vm474, %v453, 0
      %v497 = vsel %vm474, %v454, 0
      %v500 = vsel %vm474, %v455, 0
      %v503 = vsel %vm474, %v456, 0
      %v506 = vsel %vm474, %v457, 0
      %v509 = vsel %vm474, %v458, 0
      %v512 = vsel %vm474, %v459, 0
      %v515 = vsel %vm474, %v460, 0
      %v518 = vsel %vm474, %v461, 0
      %v521 = vsel %vm474, %v462, 0
      %523 = vmatprep.subr.mxu0 0.0
      %524 = vmatpush1.msra.mxu0 %v463
      %525 = vmatprep.subr.mxu0 0.0
      %526 = vmatpush1.msra.mxu0 %v464
      %527 = vmatprep.subr.mxu0 0.0
      %528 = vmatpush1.msra.mxu0 %v465
      %529 = vmatprep.subr.mxu0 0.0
      %530 = vmatpush1.msra.mxu0 %v466
      %531 = vmatprep.subr.mxu0 0.0
      %532 = vmatpush1.msra.mxu0 0.0
      %533 = vmatprep.subr.mxu0 0.0
      %534 = vmatpush1.msra.mxu0 0.0
      %535 = vmatprep.subr.mxu0 0.0
      %536 = vmatpush1.msra.mxu0 0.0
      %537 = vmatprep.subr.mxu0 0.0
      %538 = vmatpush1.msra.mxu0 0.0
      %539 = vmatprep.subr.mxu0 0.0
      %540 = vmatpush1.msra.mxu0 0.0
      %541 = vmatprep.subr.mxu0 0.0
      %542 = vmatpush1.msra.mxu0 0.0
      %543 = vmatprep.subr.mxu0 0.0
      %544 = vmatpush1.msra.mxu0 0.0
      %545 = vmatprep.subr.mxu0 0.0
      %546 = vmatpush1.msra.mxu0 0.0
      %547 = vmatprep.subr.mxu0 0.0
      %548 = vmatpush1.msra.mxu0 0.0
      %549 = vmatprep.subr.mxu0 0.0
      %550 = vmatpush1.msra.mxu0 0.0
      %551 = vmatprep.subr.mxu0 0.0
      %552 = vmatpush1.msra.mxu0 0.0
      %553 = vmatprep.subr.mxu0 0.0
      %554 = vmatpush1.msra.mxu0 0.0
      %555 = vmatprep.subr.mxu0 0.0
      %556 = vmatpush1.msra.mxu0 0.0
      %557 = vmatprep.subr.mxu0 0.0
      %558 = vmatpush1.msra.mxu0 0.0
      %559 = vmatprep.subr.mxu0 0.0
      %560 = vmatpush1.msra.mxu0 0.0
      %561 = vmatprep.subr.mxu0 0.0
      %562 = vmatpush1.msra.mxu0 0.0
      %563 = vmatprep.subr.mxu0 0.0
      %564 = vmatpush1.msra.mxu0 0.0
      %565 = vmatprep.subr.mxu0 0.0
      %566 = vmatpush1.msra.mxu0 0.0
      %567 = vmatprep.subr.mxu0 0.0
      %568 = vmatpush1.msra.mxu0 0.0
      %569 = vmatprep.subr.mxu0 0.0
      %570 = vmatpush1.msra.mxu0 0.0
      %571 = vmatprep.subr.mxu0 0.0
      %572 = vmatpush1.msra.mxu0 0.0
      %573 = vmatprep.subr.mxu0 0.0
      %574 = vmatpush1.msra.mxu0 0.0
      %575 = vmatprep.subr.mxu0 0.0
      %576 = vmatpush1.msra.mxu0 0.0
      %577 = vmatprep.subr.mxu0 0.0
      %578 = vmatpush1.msra.mxu0 0.0
      %579 = vmatprep.subr.mxu0 0.0
      %580 = vmatpush1.msra.mxu0 0.0
      %581 = vmatprep.subr.mxu0 0.0
      %582 = vmatpush1.msra.mxu0 0.0
      %583 = vmatprep.subr.mxu0 0.0
      %584 = vmatpush1.msra.mxu0 0.0
      %585 = vmatprep.subr.mxu0 0.0
      %586 = vmatpush1.msra.mxu0 0.0
      %587 = vmatprep.mubr.f32.mxu0 0.0
      %588 = vmatmul.mubr.f32.gmra.mrb[0].mxu0 %v476
      %v589 = vpop.f32.mrb[0].mxu0
      %v590 = vadd.f32 %v472, %v589
      %v591 = vpop.f32.mrb[0].mxu0
      %592 = vmatprep.mubr.f32.mxu0 0.0
      %593 = vmatmul.mubr.f32.gmra.mrb[0].mxu0 %v479
      %v594 = vpop.f32.mrb[0].mxu0
      %v595 = vadd.f32 %v472, %v594
      %v596 = vpop.f32.mrb[0].mxu0
      %597 = vmatprep.mubr.f32.mxu0 0.0
      %598 = vmatmul.mubr.f32.gmra.mrb[0].mxu0 %v482
      %v599 = vpop.f32.mrb[0].mxu0
      %v600 = vadd.f32 %v472, %v599
      %v601 = vpop.f32.mrb[0].mxu0
      %602 = vmatprep.mubr.f32.mxu0 0.0
      %603 = vmatmul.mubr.f32.gmra.mrb[0].mxu0 %v485
      %v604 = vpop.f32.mrb[0].mxu0
      %v605 = vadd.f32 %v472, %v604
      %v606 = vpop.f32.mrb[0].mxu0
      %607 = vmatprep.mubr.f32.mxu0 0.0
      %608 = vmatmul.mubr.f32.gmra.mrb[0].mxu0 %v488
      %v609 = vpop.f32.mrb[0].mxu0
      %v610 = vadd.f32 %v472, %v609
      %v611 = vpop.f32.mrb[0].mxu0
      %612 = vmatprep.mubr.f32.mxu0 0.0
      %613 = vmatmul.mubr.f32.gmra.mrb[0].mxu0 %v491
      %v614 = vpop.f32.mrb[0].mxu0
      %v615 = vadd.f32 %v472, %v614
      %v616 = vpop.f32.mrb[0].mxu0
      %617 = vmatprep.mubr.f32.mxu0 0.0
      %618 = vmatmul.mubr.f32.gmra.mrb[0].mxu0 %v494
      %v619 = vpop.f32.mrb[0].mxu0
      %v620 = vadd.f32 %v472, %v619
      %v621 = vpop.f32.mrb[0].mxu0
      %622 = vmatprep.mubr.f32.mxu0 0.0
      %623 = vmatmul.mubr.f32.gmra.mrb[0].mxu0 %v497
      %v624 = vpop.f32.mrb[0].mxu0
      %v625 = vadd.f32 %v472, %v624
      %v626 = vpop.f32.mrb[0].mxu0
      %627 = vmatprep.mubr.f32.mxu0 0.0
      %628 = vmatmul.mubr.f32.gmra.mrb[0].mxu0 %v500
      %v629 = vpop.f32.mrb[0].mxu0
      %v630 = vadd.f32 %v472, %v629
      %v631 = vpop.f32.mrb[0].mxu0
      %632 = vmatprep.mubr.f32.mxu0 0.0
      %633 = vmatmul.mubr.f32.gmra.mrb[0].mxu0 %v503
      %v634 = vpop.f32.mrb[0].mxu0
      %v635 = vadd.f32 %v472, %v634
      %v636 = vpop.f32.mrb[0].mxu0
      %637 = vmatprep.mubr.f32.mxu0 0.0
      %638 = vmatmul.mubr.f32.gmra.mrb[0].mxu0 %v506
      %v639 = vpop.f32.mrb[0].mxu0
      %v640 = vadd.f32 %v472, %v639
      %v641 = vpop.f32.mrb[0].mxu0
      %642 = vmatprep.mubr.f32.mxu0 0.0
      %643 = vmatmul.mubr.f32.gmra.mrb[0].mxu0 %v509
      %v644 = vpop.f32.mrb[0].mxu0
      %v645 = vadd.f32 %v472, %v644
      %v646 = vpop.f32.mrb[0].mxu0
      %647 = vmatprep.mubr.f32.mxu0 0.0
      %648 = vmatmul.mubr.f32.gmra.mrb[0].mxu0 %v512
      %v649 = vpop.f32.mrb[0].mxu0
      %v650 = vadd.f32 %v472, %v649
      %v651 = vpop.f32.mrb[0].mxu0
      %652 = vmatprep.mubr.f32.mxu0 0.0
      %653 = vmatmul.mubr.f32.gmra.mrb[0].mxu0 %v515
      %v654 = vpop.f32.mrb[0].mxu0
      %v655 = vadd.f32 %v472, %v654
      %v656 = vpop.f32.mrb[0].mxu0
      %657 = vmatprep.mubr.f32.mxu0 0.0
      %658 = vmatmul.mubr.f32.gmra.mrb[0].mxu0 %v518
      %v659 = vpop.f32.mrb[0].mxu0
      %v660 = vadd.f32 %v472, %v659
      %v661 = vpop.f32.mrb[0].mxu0
      %662 = vmatprep.mubr.f32.mxu0 0.0
      %663 = vmatmul.mubr.f32.gmra.mrb[0].mxu0 %v521
      %v664 = vpop.f32.mrb[0].mxu0
      %v665 = vadd.f32 %v472, %v664
      %v666 = vpop.f32.mrb[0].mxu0
      %667 = vdwg.mxu0
      %vm668 = vcmask 64512
      %669 = vst.msk [vmem:[%s226] sm:$0xff] %vm668, %v590
      %670 = vst.msk [vmem:[%s226 + $0x8] sm:$0xff] %vm668, %v595
      %671 = vst.msk [vmem:[%s226 + $0x10] sm:$0xff] %vm668, %v600
      %672 = vst.msk [vmem:[%s226 + $0x18] sm:$0xff] %vm668, %v605
      %673 = vst.msk [vmem:[%s226 + $0x20] sm:$0xff] %vm668, %v610
      %674 = vst.msk [vmem:[%s226 + $0x28] sm:$0xff] %vm668, %v615
      %675 = vst.msk [vmem:[%s226 + $0x30] sm:$0xff] %vm668, %v620
      %676 = vst.msk [vmem:[%s226 + $0x38] sm:$0xff] %vm668, %v625
      %677 = vst.msk [vmem:[%s226 + $0x40] sm:$0xff] %vm668, %v630
      %678 = vst.msk [vmem:[%s226 + $0x48] sm:$0xff] %vm668, %v635
      %679 = vst.msk [vmem:[%s226 + $0x50] sm:$0xff] %vm668, %v640
      %680 = vst.msk [vmem:[%s226 + $0x58] sm:$0xff] %vm668, %v645
      %681 = vst.msk [vmem:[%s226 + $0x60] sm:$0xff] %vm668, %v650
      %682 = vst.msk [vmem:[%s226 + $0x68] sm:$0xff] %vm668, %v655
      %683 = vst.msk [vmem:[%s226 + $0x70] sm:$0xff] %vm668, %v660
      %684 = vst.msk [vmem:[%s226 + $0x78] sm:$0xff] %vm668, %v665
      %s685 = smul.u32 16, %s16
      %p686 = scmp.lt.s32.totalorder %s685, 63
      %s687 = scalar_select %p686, %s685, 63
      %s688 = smul.addr %s687, 8
      %s689 = scalar_lea.vmem %s5, %s688
      // Predicated region
      $region41: #{tpu_custom_call.1} parent=39 // pred_check
        %p690 = pneg %p144
      $region42: #{tpu_custom_call.1} parent=39 // pred_check_branch
        %692 = sbr.rel (%p690) target = $region44
      $region43: #{tpu_custom_call.1} parent=39 // pred_region
        %s693 = smul.u32 16, %s16
      $region44: #{tpu_custom_call.1} parent=39 // pred_fallthru
        _
    $region40: #{tpu_custom_call.1} parent=5 // pred_fallthru
      _
    %p694 = scmp.le.s32.totalorder 2, %s11
    // Predicated region
    $region45: #{tpu_custom_call.1} parent=5 // pred_check
      %p695 = pneg %p694
    $region46: #{tpu_custom_call.1} parent=5 // pred_check_branch
      %697 = sbr.rel (%p695) target = $region48
    $region47: #{tpu_custom_call.1} parent=5 // pred_region
      %s698 = ssub.s32 %s11, 2
      // Predicated region
      $region49: #{tpu_custom_call.1} parent=47 // pred_check
        %p699 = pneg %p150
      $region50: #{tpu_custom_call.1} parent=47 // pred_check_branch
        %701 = sbr.rel (%p699) target = $region52
      $region51: #{tpu_custom_call.1} parent=47 // pred_region
        %s702 = smul.u32 16, %s17
        %p703 = scmp.lt.s32.totalorder %s702, 63
        %s704 = scalar_select %p703, %s702, 63
        %s705 = smul.addr %s704, 8
        %s706 = scalar_lea.vmem %s5, %s705
      $region52: #{tpu_custom_call.1} parent=47 // pred_fallthru
        _
    $region48: #{tpu_custom_call.1} parent=5 // pred_fallthru
      _
  $region6: #{tpu_custom_call.1} parent=0 // loop_footer
    %s15 = sadd.s32 1, %s11
  $region7: #{tpu_custom_call.1} parent=0 // loop_footer_branch
    %10 = sbr.rel target = $region3
  $region8: #{tpu_custom_call.1} parent=0 // loop_exit
    _

</llo_original>
